<compile_context>
chip_gen: v6e
topology: v6e:2x2x1
jax: 0.10.0
libtpu: 0.0.40
codegen_flags: <defaults>
</compile_context>

<pallas_src>
import functools

import jax
import jax.numpy as jnp
from jax.experimental import pallas as pl
from jax.experimental.pallas import tpu as pltpu

_MIB = 1024 * 1024


def _round_up(x, m):
    return (x + m - 1) // m * m


def _cdiv(a, b):
    return (a + b - 1) // b


def _tpu_layout():
    """Best-effort (per-TensorCore VMEM bytes, TensorCores per chip)."""
    vmem, n_tc = 64 * _MIB, 1                 # conservative default
    try:
        kind = jax.devices()[0].device_kind.lower()
    except Exception:
        return vmem, n_tc
    if "7" in kind:                            # TPU7x / v7x: 2 TCs, 64 MiB each
        return 64 * _MIB, 2
    if any(t in kind for t in ("v4", "v5", "v6")):
        return 128 * _MIB, 1
    return vmem, n_tc


# ----------------------------------------------------------------------------
# Kernel bodies
# ----------------------------------------------------------------------------

def _gate_epilogue(gates_ref, c_ref, h_out_ref, c_out_ref, hp, chunk):
    """Gate nonlinearities + state update, per <=`chunk`-lane column slab.

    gates_ref holds bias-added f32 pre-activations laid out as four Hp-wide
    lane-aligned slabs [f | i | o | u]; the f/i/o slabs were pre-scaled by 0.5
    at param-prep time so sigmoid(x) == 0.5*tanh(pre_scaled)+0.5 costs a single
    EUP op.  Working per chunk bounds live temporaries (no (TB, 3*Hp)
    intermediates -> no vreg spills at large Hp), and every store is
    lane-dense (chunk is a multiple of 128).
    """
    for s in range(0, hp, chunk):
        cw = min(chunk, hp - s)
        f = 0.5 * jnp.tanh(gates_ref[:, s:s + cw]) + 0.5
        i = 0.5 * jnp.tanh(gates_ref[:, hp + s:hp + s + cw]) + 0.5
        o = 0.5 * jnp.tanh(gates_ref[:, 2 * hp + s:2 * hp + s + cw]) + 0.5
        u = jnp.tanh(gates_ref[:, 3 * hp + s:3 * hp + s + cw])
        new_c = i * u + f * c_ref[:, s:s + cw].astype(jnp.float32)
        new_h = o * jnp.tanh(new_c)
        c_out_ref[:, s:s + cw] = new_c.astype(c_out_ref.dtype)
        h_out_ref[:, s:s + cw] = new_h.astype(h_out_ref.dtype)


def _lstm_kernel_resident(xh_ref, w_ref, b_ref, c_ref, h_out_ref, c_out_ref,
                          gates_ref, *, hp, chunk):
    """Grid = (batch tiles,).  Weight fully VMEM-resident (constant index_map),
    so the whole K reduction is a single MXU dot per batch tile."""
    gates_ref[...] = (
        jnp.dot(xh_ref[...], w_ref[...], preferred_element_type=jnp.float32)
        + b_ref[...].astype(jnp.float32))
    _gate_epilogue(gates_ref, c_ref, h_out_ref, c_out_ref, hp, chunk)


def _lstm_kernel_ktiled(xh_ref, w_ref, b_ref, c_ref, h_out_ref, c_out_ref,
                        acc_ref, *, hp, chunk):
    """Grid = (batch tiles, K tiles); K is the reduction ('arbitrary') axis."""
    k = pl.program_id(1)

    @pl.when(k == 0)
    def _():
        # Fold the bias into the accumulator init (saves a separate wide add).
        acc_ref[...] = jnp.broadcast_to(b_ref[...].astype(jnp.float32),
                                        acc_ref.shape)

    acc_ref[...] += jnp.dot(xh_ref[...], w_ref[...],
                            preferred_element_type=jnp.float32)

    @pl.when(k == pl.num_programs(1) - 1)
    def _():
        _gate_epilogue(acc_ref, c_ref, h_out_ref, c_out_ref, hp, chunk)


# ----------------------------------------------------------------------------
# One-time parameter prep (hoisted out of the per-step path)
# ----------------------------------------------------------------------------

def prepare_lstm_params(w, b, input_size, hidden_size, param_dtype=None):
    """w: (4H, D+H) torch-Linear layout, gate order [f|i|o|u]; b: (4H,).

    Returns (w_p, b_p, meta):
      w_p: (Kp, 4*Hp) with K = D+H padded to a multiple of 128 and each gate's
           columns in its own Hp-wide lane-aligned slab; the f/i/o slabs are
           pre-scaled by 0.5 (sigmoid-as-tanh identity moved to prep time).
      b_p: (1, 4*Hp), f32, matching layout/scaling.
    """
    D, H = input_size, hidden_size
    K = D + H
    Hp = _round_up(H, 128)
    Kp = _round_up(K, 128)

    w = jnp.asarray(w, jnp.float32)
    b = jnp.asarray(b, jnp.float32)
    gate_scale = jnp.array([0.5, 0.5, 0.5, 1.0], jnp.float32)

    w_g = jnp.transpose(w).reshape(K, 4, H) * gate_scale[None, :, None]
    w_g = jnp.pad(w_g, ((0, Kp - K), (0, 0), (0, Hp - H)))
    w_p = w_g.reshape(Kp, 4 * Hp)
    if param_dtype is not None:
        w_p = w_p.astype(param_dtype)        # e.g. bf16 for MXU peak (v5e-v7x)

    b_g = jnp.pad(b.reshape(4, H) * gate_scale[:, None], ((0, 0), (0, Hp - H)))
    b_p = b_g.reshape(1, 4 * Hp)             # kept f32 (added to f32 acc)

    meta = dict(D=D, H=H, Hp=Hp, K=K, Kp=Kp)
    return w_p, b_p, meta


# ----------------------------------------------------------------------------
# Tiling plan + wrapper
# ----------------------------------------------------------------------------

def _plan(B, Kp, Hp, w_itemsize, c_itemsize, out_itemsize, force_stream):
    vmem_bytes, n_tc = _tpu_layout()
    cap = 56 * _MIB if vmem_bytes <= 64 * _MIB else 100 * _MIB

    # Sublane packing: 8 rows (f32), 16 (bf16), 32 (fp8/int8).
    sub = {4: 8, 2: 16, 1: 32}.get(w_itemsize, 8)

    # Batch tiles: near-full last tile, tiles <= 256 rows, and >= n_tc tiles on
    # multi-TensorCore parts (v7x megacore) when the batch is big enough.
    nb = max(1, _cdiv(B, 256))
    if n_tc > 1 and B > n_tc * sub:
        nb = max(nb, n_tc)
    TB = min(256, _round_up(_cdiv(B, nb), sub))
    Bp = _round_up(B, TB)

    gate_cols = 4 * Hp
    # Double-buffered pipelined operands + f32 gate scratch + headroom.
    fixed = (2 * TB * Hp * c_itemsize              # c tiles
             + 2 * 2 * TB * Hp * out_itemsize      # new_h, new_c tiles
             + 2 * gate_cols * 4                   # bias
             + TB * gate_cols * 4                  # f32 gate scratch
             + 6 * _MIB)                           # epilogue temps / compiler scratch

    # Preferred: fully VMEM-resident weight -> one dot over the whole K,
    # weight HBM traffic paid exactly once per call.
    res_foot = fixed + 2 * Kp * gate_cols * w_itemsize + 2 * TB * Kp * w_itemsize
    if not force_stream and res_foot <= cap:
        return dict(TB=TB, Bp=Bp, resident=True, TK=Kp,
                    vmem_limit=int(min(cap, max(res_foot, 32 * _MIB))))

    # Fallback: stream the weight along a K-tiled reduction axis.
    # TODO(synk): add gate-column (N) tiling for H ~ 4096+ on 64-MiB-VMEM parts.
    # TODO(synk): sweep pl.Buffered(3) on the weight spec for v5e streaming.
    for TK in (512, 256, 128):
        if Kp % TK:
            continue
        foot = fixed + 2 * TK * gate_cols * w_itemsize + 2 * TB * TK * w_itemsize
        if foot <= cap:
            return dict(TB=TB, Bp=Bp, resident=False, TK=TK,
                        vmem_limit=int(min(cap, max(foot, 32 * _MIB))))
    return dict(TB=TB, Bp=Bp, resident=False, TK=128, vmem_limit=int(cap))


def lstm_cell(x, h, c, w_p, b_p, meta, *, force_stream=False):
    """One LSTMCell step.  x: (B, D); h, c: (B, H); params from
    prepare_lstm_params.  Returns (new_h, new_c), new_h in h.dtype and new_c
    in c.dtype (cell state never down-cast to x.dtype)."""
    B = x.shape[0]
    H, Hp, K, Kp = meta["H"], meta["Hp"], meta["K"], meta["Kp"]
    compute_dtype = w_p.dtype

    plan = _plan(B, Kp, Hp,
                 jnp.dtype(compute_dtype).itemsize,
                 jnp.dtype(c.dtype).itemsize,
                 max(jnp.dtype(h.dtype).itemsize, jnp.dtype(c.dtype).itemsize),
                 force_stream)
    TB, Bp, TK = plan["TB"], plan["Bp"], plan["TK"]
    chunk = min(512, Hp)

    # TODO(synk): for sequence workloads, add a time-loop grid axis with h/c in
    # VMEM scratch and weight index_maps ignoring t, so this concat/pad (a full
    # (B, D+H) HBM round trip) and the weight DMA are not re-paid every step.
    xh = jnp.concatenate([x, h], axis=1)                        # (B, K)
    xh = jnp.pad(xh, ((0, Bp - B), (0, Kp - K))).astype(compute_dtype)
    c_p = jnp.pad(c, ((0, Bp - B), (0, Hp - H)))                # (Bp, Hp)

    out_shape = (jax.ShapeDtypeStruct((Bp, Hp), h.dtype),
                 jax.ShapeDtypeStruct((Bp, Hp), c.dtype))
    scratch = [pltpu.VMEM((TB, 4 * Hp), jnp.float32)]           # f32 gate slab

    if plan["resident"]:
        kernel = functools.partial(_lstm_kernel_resident, hp=Hp, chunk=chunk)
        h_pad, c_pad = pl.pallas_call(
            kernel,
            out_shape=out_shape,
            grid=(Bp // TB,),
            in_specs=[
                pl.BlockSpec((TB, Kp), lambda i: (i, 0)),        # [x|h] tile
                pl.BlockSpec((Kp, 4 * Hp), lambda i: (0, 0)),    # resident weight
                pl.BlockSpec((1, 4 * Hp), lambda i: (0, 0)),     # bias
                pl.BlockSpec((TB, Hp), lambda i: (i, 0)),        # c tile
            ],
            out_specs=(
                pl.BlockSpec((TB, Hp), lambda i: (i, 0)),        # new_h
                pl.BlockSpec((TB, Hp), lambda i: (i, 0)),        # new_c
            ),
            scratch_shapes=scratch,
            compiler_params=pltpu.CompilerParams(
                dimension_semantics=("parallel",),
                vmem_limit_bytes=plan["vmem_limit"],
            ),
        )(xh, w_p, b_p, c_p)
    else:
        kernel = functools.partial(_lstm_kernel_ktiled, hp=Hp, chunk=chunk)
        h_pad, c_pad = pl.pallas_call(
            kernel,
            out_shape=out_shape,
            grid=(Bp // TB, Kp // TK),
            in_specs=[
                pl.BlockSpec((TB, TK), lambda i, k: (i, k)),      # [x|h] tile
                pl.BlockSpec((TK, 4 * Hp), lambda i, k: (k, 0)),  # weight tile
                pl.BlockSpec((1, 4 * Hp), lambda i, k: (0, 0)),   # bias
                pl.BlockSpec((TB, Hp), lambda i, k: (i, 0)),      # c tile
            ],
            out_specs=(
                pl.BlockSpec((TB, Hp), lambda i, k: (i, 0)),      # new_h
                pl.BlockSpec((TB, Hp), lambda i, k: (i, 0)),      # new_c
            ),
            scratch_shapes=scratch,
            compiler_params=pltpu.CompilerParams(
                dimension_semantics=("parallel", "arbitrary"),
                vmem_limit_bytes=plan["vmem_limit"],
            ),
        )(xh, w_p, b_p, c_p)

    return h_pad[:B, :H], c_pad[:B, :H]


# ----------------------------------------------------------------------------
# Pure-JAX reference + self-test
# ----------------------------------------------------------------------------

def lstm_cell_ref(x, h, c, w, b):
    """Pure-JAX reference matching the PyTorch module exactly."""
    H = h.shape[1]
    gates = jnp.concatenate([x, h], axis=1) @ w.T + b
    fio = jax.nn.sigmoid(gates[:, :3 * H])
    f, i, o = fio[:, :H], fio[:, H:2 * H], fio[:, 2 * H:3 * H]
    u = jnp.tanh(gates[:, 3 * H:])
    new_c = i * u + f * c
    new_h = o * jnp.tanh(new_c)
    return new_h, new_c


def _make_case(key, B, D, H):
    kx, kh, kc, kw, kb = jax.random.split(key, 5)
    x = jax.random.normal(kx, (B, D), jnp.float32)
    h = jax.random.normal(kh, (B, H), jnp.float32)
    c = jax.random.normal(kc, (B, H), jnp.float32)
    bound = 1.0 / jnp.sqrt(jnp.float32(D + H))     # PyTorch-style uniform init
    w = jax.random.uniform(kw, (4 * H, D + H), jnp.float32, -bound, bound)
    b = jax.random.uniform(kb, (4 * H,), jnp.float32, -bound, bound)
    return x, h, c, w, b


if __name__ == "__main__":
    key = jax.random.PRNGKey(0)
    k1, k2, k3 = jax.random.split(key, 3)

    # 1) f32, VMEM-resident-weight path (small shapes).
    B, D, H = 8, 32, 32
    x, h0, c0, w, b = _make_case(k1, B, D, H)
    w_p, b_p, meta = prepare_lstm_params(w, b, D, H)
    h1, c1 = jax.block_until_ready(lstm_cell(x, h0, c0, w_p, b_p, meta))
    h_ref, c_ref = lstm_cell_ref(x, h0, c0, w, b)
    assert jnp.allclose(h1, h_ref, atol=2e-5, rtol=2e-5)
    assert jnp.allclose(c1, c_ref, atol=2e-5, rtol=2e-5)

    # 2) f32, K-tiled streaming fallback (multi-step reduction, padded H and K).
    B, D, H = 16, 200, 120
    x, h0, c0, w, b = _make_case(k2, B, D, H)
    w_p, b_p, meta = prepare_lstm_params(w, b, D, H)
    h1, c1 = jax.block_until_ready(
        lstm_cell(x, h0, c0, w_p, b_p, meta, force_stream=True))
    h_ref, c_ref = lstm_cell_ref(x, h0, c0, w, b)
    assert jnp.allclose(h1, h_ref, atol=1e-4, rtol=1e-4)
    assert jnp.allclose(c1, c_ref, atol=1e-4, rtol=1e-4)

    # 3) bf16 params/activations into the MXU (f32 accumulate), loose tolerance.
    B, D, H = 8, 32, 32
    x, h0, c0, w, b = _make_case(k3, B, D, H)
    w_p, b_p, meta = prepare_lstm_params(w, b, D, H, param_dtype=jnp.bfloat16)
    h1, c1 = jax.block_until_ready(lstm_cell(x, h0, c0, w_p, b_p, meta))
    h_ref, c_ref = lstm_cell_ref(x, h0, c0, w, b)
    assert jnp.allclose(h1, h_ref, atol=8e-2, rtol=8e-2)
    assert jnp.allclose(c1, c_ref, atol=8e-2, rtol=8e-2)

    print("KERNEL_OK")
</pallas_src>

<mosaic_0001>
module attributes {stable_mosaic.version = 11 : i64} {
  func.func @_lstm_kernel_resident(%arg0: i32, %arg1: memref<8x128xf32, #tpu.memory_space<vmem>>, %arg2: memref<128x512xf32, #tpu.memory_space<vmem>>, %arg3: memref<1x512xf32, #tpu.memory_space<vmem>>, %arg4: memref<8x128xf32, #tpu.memory_space<vmem>>, %arg5: memref<8x128xf32, #tpu.memory_space<vmem>>, %arg6: memref<8x128xf32, #tpu.memory_space<vmem>>, %arg7: memref<8x512xf32, #tpu.memory_space<vmem>>) attributes {dimension_semantics = [#tpu.dimension_semantics<parallel>], iteration_bounds = array<i64: 1>, scalar_prefetch = 0 : i64, scratch_operands = 1 : i64, tpu.core_type = #tpu.core_type<tc>, window_params = [{transform_indices = @transform_0, window_bounds = array<i64: 8, 128>}, {pipeline_mode = #tpu.pipeline_mode<synchronous>, transform_indices = @transform_1, window_bounds = array<i64: 128, 512>}, {pipeline_mode = #tpu.pipeline_mode<synchronous>, transform_indices = @transform_2, window_bounds = array<i64: 1, 512>}, {transform_indices = @transform_3, window_bounds = array<i64: 8, 128>}, {transform_indices = @transform_4, window_bounds = array<i64: 8, 128>}, {transform_indices = @transform_5, window_bounds = array<i64: 8, 128>}]} {
    %c0 = arith.constant 0 : index
    %c0_0 = arith.constant 0 : index
    %0 = vector.load %arg1[%c0, %c0_0] : memref<8x128xf32, #tpu.memory_space<vmem>>, vector<8x128xf32>
    %c0_1 = arith.constant 0 : index
    %c0_2 = arith.constant 0 : index
    %1 = vector.load %arg2[%c0_1, %c0_2] : memref<128x512xf32, #tpu.memory_space<vmem>>, vector<128x512xf32>
    %cst = arith.constant dense<0.000000e+00> : vector<8x512xf32>
    %2 = tpu.matmul %0, %1, %cst {dimension_numbers = #tpu.dot_dimension_numbers<[1], [0], [0], [1], [0, 0, 1, 1], [], []>} : vector<8x128xf32>, vector<128x512xf32>, vector<8x512xf32> -> vector<8x512xf32>
    %c0_3 = arith.constant 0 : index
    %c0_4 = arith.constant 0 : index
    %3 = vector.load %arg3[%c0_3, %c0_4] : memref<1x512xf32, #tpu.memory_space<vmem>>, vector<1x512xf32>
    %4 = vector.broadcast %3 : vector<1x512xf32> to vector<8x512xf32>
    %5 = arith.addf %2, %4 : vector<8x512xf32>
    %c0_5 = arith.constant 0 : index
    %c0_6 = arith.constant 0 : index
    %6 = vector.load %arg7[%c0_5, %c0_6] : memref<8x512xf32, #tpu.memory_space<vmem>>, vector<8x512xf32>
    tpu.vector_store %arg7[%c0_5, %c0_6], %5 {strides = array<i32>} : memref<8x512xf32, #tpu.memory_space<vmem>>, vector<8x512xf32>,
    %c0_7 = arith.constant 0 : index
    %c0_8 = arith.constant 0 : index
    %7 = vector.load %arg7[%c0_7, %c0_8] : memref<8x512xf32, #tpu.memory_space<vmem>>, vector<8x128xf32>
    %8 = math.tanh %7 : vector<8x128xf32>
    %cst_9 = arith.constant 5.000000e-01 : f32
    %9 = vector.broadcast %cst_9 : f32 to vector<8x128xf32>
    %10 = arith.mulf %9, %8 : vector<8x128xf32>
    %cst_10 = arith.constant 5.000000e-01 : f32
    %11 = vector.broadcast %cst_10 : f32 to vector<8x128xf32>
    %12 = arith.addf %10, %11 : vector<8x128xf32>
    %c0_11 = arith.constant 0 : index
    %c128 = arith.constant 128 : index
    %13 = vector.load %arg7[%c0_11, %c128] : memref<8x512xf32, #tpu.memory_space<vmem>>, vector<8x128xf32>
    %14 = math.tanh %13 : vector<8x128xf32>
    %cst_12 = arith.constant 5.000000e-01 : f32
    %15 = vector.broadcast %cst_12 : f32 to vector<8x128xf32>
    %16 = arith.mulf %15, %14 : vector<8x128xf32>
    %cst_13 = arith.constant 5.000000e-01 : f32
    %17 = vector.broadcast %cst_13 : f32 to vector<8x128xf32>
    %18 = arith.addf %16, %17 : vector<8x128xf32>
    %c0_14 = arith.constant 0 : index
    %c256 = arith.constant 256 : index
    %19 = vector.load %arg7[%c0_14, %c256] : memref<8x512xf32, #tpu.memory_space<vmem>>, vector<8x128xf32>
    %20 = math.tanh %19 : vector<8x128xf32>
    %cst_15 = arith.constant 5.000000e-01 : f32
    %21 = vector.broadcast %cst_15 : f32 to vector<8x128xf32>
    %22 = arith.mulf %21, %20 : vector<8x128xf32>
    %cst_16 = arith.constant 5.000000e-01 : f32
    %23 = vector.broadcast %cst_16 : f32 to vector<8x128xf32>
    %24 = arith.addf %22, %23 : vector<8x128xf32>
    %c0_17 = arith.constant 0 : index
    %c384 = arith.constant 384 : index
    %25 = vector.load %arg7[%c0_17, %c384] : memref<8x512xf32, #tpu.memory_space<vmem>>, vector<8x128xf32>
    %26 = math.tanh %25 : vector<8x128xf32>
    %27 = arith.mulf %18, %26 : vector<8x128xf32>
    %c0_18 = arith.constant 0 : index
    %c0_19 = arith.constant 0 : index
    %28 = vector.load %arg4[%c0_18, %c0_19] : memref<8x128xf32, #tpu.memory_space<vmem>>, vector<8x128xf32>
    %29 = arith.mulf %12, %28 : vector<8x128xf32>
    %30 = arith.addf %27, %29 : vector<8x128xf32>
    %31 = math.tanh %30 : vector<8x128xf32>
    %32 = arith.mulf %24, %31 : vector<8x128xf32>
    %c0_20 = arith.constant 0 : index
    %c0_21 = arith.constant 0 : index
    %33 = vector.load %arg6[%c0_20, %c0_21] : memref<8x128xf32, #tpu.memory_space<vmem>>, vector<8x128xf32>
    tpu.vector_store %arg6[%c0_20, %c0_21], %30 {strides = array<i32>} : memref<8x128xf32, #tpu.memory_space<vmem>>, vector<8x128xf32>,
    %c0_22 = arith.constant 0 : index
    %c0_23 = arith.constant 0 : index
    %34 = vector.load %arg5[%c0_22, %c0_23] : memref<8x128xf32, #tpu.memory_space<vmem>>, vector<8x128xf32>
    tpu.vector_store %arg5[%c0_22, %c0_23], %32 {strides = array<i32>} : memref<8x128xf32, #tpu.memory_space<vmem>>, vector<8x128xf32>,
    return
  }
  func.func @transform_0(%arg0: i32) -> (i32, i32) {
    %c0_i32 = arith.constant 0 : i32
    %c0_i32_0 = arith.constant 0 : i32
    return %arg0, %c0_i32 : i32, i32
  }
  func.func @transform_1(%arg0: i32) -> (i32, i32) {
    %c0_i32 = arith.constant 0 : i32
    %c0_i32_0 = arith.constant 0 : i32
    %c0_i32_1 = arith.constant 0 : i32
    return %c0_i32, %c0_i32_0 : i32, i32
  }
  func.func @transform_2(%arg0: i32) -> (i32, i32) {
    %c0_i32 = arith.constant 0 : i32
    %c0_i32_0 = arith.constant 0 : i32
    %c0_i32_1 = arith.constant 0 : i32
    return %c0_i32, %c0_i32_0 : i32, i32
  }
  func.func @transform_3(%arg0: i32) -> (i32, i32) {
    %c0_i32 = arith.constant 0 : i32
    %c0_i32_0 = arith.constant 0 : i32
    return %arg0, %c0_i32 : i32, i32
  }
  func.func @transform_4(%arg0: i32) -> (i32, i32) {
    %c0_i32 = arith.constant 0 : i32
    %c0_i32_0 = arith.constant 0 : i32
    return %arg0, %c0_i32 : i32, i32
  }
  func.func @transform_5(%arg0: i32) -> (i32, i32) {
    %c0_i32 = arith.constant 0 : i32
    %c0_i32_0 = arith.constant 0 : i32
    return %arg0, %c0_i32 : i32, i32
  }
}

</mosaic_0001>

<llo_original>
// kernel: tpu_custom_call.1
$region0: #{tpu_custom_call.1}
  #allocation0 [shape = 'u32[]', space=smem, size = 0x4, offset = 0x4, fixed_abs, tag = 'smem constant byte address 0x4 - core index']
  #allocation1 [shape = 'u32[144,128]{1,0:T(1,128)}', space=vmem, size = 0x12000, scoped, tag = 'internal scratch']
  #allocation2 [shape = 'f32[8,512]{1,0:T(8,128)}', space=vmem, size = 0x4000, scoped, tag = 'scratch operand']
  %s0 = inlined_call_operand.hbm [shape: f32[8,128], index: 0, kind: input, shape index: {}]
  %s1 = inlined_call_operand.hbm [shape: f32[128,512], index: 1, kind: input, shape index: {}]
  %s2 = inlined_call_operand.hbm [shape: f32[1,512], index: 2, kind: input, shape index: {}]
  %s3 = inlined_call_operand.hbm [shape: f32[8,128], index: 3, kind: input, shape index: {}]
  %s4 = inlined_call_operand.hbm [shape: f32[8,128], index: 4, kind: output, shape index: {0}]
  %s5 = inlined_call_operand.hbm [shape: f32[8,128], index: 5, kind: output, shape index: {1}]
  %6 = xla_tuple %s4, %s5
  %s7 = sld [smem:[#allocation0]]
  $region50: #{tpu_custom_call.1} parent=0
    _
  %s9 = ssub.s32 1, %s7
  %s10 = scalar_select 0, %s9, %s7
  $region1: #{tpu_custom_call.1} parent=0
    #allocation3 [shape = 'u8[4096]{0}', space=vmem, size = 0x1000, scoped, tag = 'input window, operand 0, single buffered']
    #allocation4 [shape = 's32[1]{0}', space=sflag, size = 0x4, scoped, tag = 'scoped memory for tpu_custom_call.1']
    #allocation5 [shape = 's32[1]{0}', space=sflag, size = 0x4, scoped, tag = 'scoped memory for tpu_custom_call.1']
    #allocation6 [shape = 'u8[262144]{0}', space=vmem, size = 0x40000, scoped, tag = 'input window, operand 1, single buffered']
    #allocation7 [shape = 's32[1]{0}', space=sflag, size = 0x4, scoped, tag = 'scoped memory for tpu_custom_call.1']
    #allocation8 [shape = 'u8[2048]{0}', space=vmem, size = 0x800, scoped, tag = 'input window, operand 2, single buffered']
    #allocation9 [shape = 'u8[4096]{0}', space=vmem, size = 0x1000, scoped, tag = 'input window, operand 3, single buffered']
    #allocation10 [shape = 's32[1]{0}', space=sflag, size = 0x4, scoped, tag = 'scoped memory for tpu_custom_call.1']
    #allocation11 [shape = 'u8[4096]{0}', space=vmem, size = 0x1000, scoped, tag = 'output window, operand 0, single buffered']
    #allocation12 [shape = 'u8[4096]{0}', space=vmem, size = 0x1000, scoped, tag = 'output window, operand 1, single buffered']
    #allocation13 [shape = 's32[1]{0}', space=sflag, size = 0x4, scoped, tag = 'scoped memory for tpu_custom_call.1']
    %11 = vsyncpa [#allocation4], 0
    %12 = vsyncpa [#allocation7], 0
    %13 = vsyncpa [#allocation10], 0
    %14 = vsyncpa [#allocation5], 0
    %15 = vsyncpa [#allocation13], 0
    // Predicated region
    $region2: #{tpu_custom_call.1} parent=1 // pred_check
      _
    $region3: #{tpu_custom_call.1} parent=1 // pred_check_branch
      %17 = sbr.rel (0) target = $region5
    $region4: #{tpu_custom_call.1} parent=1 // pred_region
      %s19 = ssub.s32 128, 128
      %20 = vsyncadd [#allocation4], %s19
      %s22 = sshll.u32 [#allocation3], 4
      %s23 = int_to_ptr.vmem [resolvable:$true] %s22
      %25 = dma.hbm_to_vmem [thread:$0]  %s0, 128, %s23, [#allocation4]
    $region5: #{tpu_custom_call.1} parent=1 // pred_fallthru
      _
    // Predicated region
    $region6: #{tpu_custom_call.1} parent=1 // pred_check
      _
    $region7: #{tpu_custom_call.1} parent=1 // pred_check_branch
      %27 = sbr.rel (0) target = $region9
    $region8: #{tpu_custom_call.1} parent=1 // pred_region
      %s29 = ssub.s32 8192, 8192
      %30 = vsyncadd [#allocation7], %s29
      %s31 = sshll.u32 [#allocation6], 4
      %s32 = int_to_ptr.vmem [resolvable:$true] %s31
      %37 = dma.hbm_to_vmem [thread:$0]  %s1, 8192, %s32, [#allocation7], 512, 512, 32
    $region9: #{tpu_custom_call.1} parent=1 // pred_fallthru
      _
    // Predicated region
    $region10: #{tpu_custom_call.1} parent=1 // pred_check
      _
    $region11: #{tpu_custom_call.1} parent=1 // pred_check_branch
      %39 = sbr.rel (0) target = $region13
    $region12: #{tpu_custom_call.1} parent=1 // pred_region
      %s41 = ssub.s32 64, 64
      %42 = vsyncadd [#allocation7], %s41
      %s44 = sshll.u32 [#allocation8], 4
      %s45 = int_to_ptr.vmem [resolvable:$true] %s44
      %47 = dma.hbm_to_vmem [thread:$0]  %s2, 64, %s45, [#allocation7]
    $region13: #{tpu_custom_call.1} parent=1 // pred_fallthru
      _
    // Predicated region
    $region14: #{tpu_custom_call.1} parent=1 // pred_check
      _
    $region15: #{tpu_custom_call.1} parent=1 // pred_check_branch
      %49 = sbr.rel (0) target = $region17
    $region16: #{tpu_custom_call.1} parent=1 // pred_region
      %s51 = ssub.s32 128, 128
      %52 = vsyncadd [#allocation10], %s51
      %s54 = sshll.u32 [#allocation9], 4
      %s55 = int_to_ptr.vmem [resolvable:$true] %s54
      %57 = dma.hbm_to_vmem [thread:$0]  %s3, 128, %s55, [#allocation10]
    $region17: #{tpu_custom_call.1} parent=1 // pred_fallthru
      _
    // Predicated region
    $region18: #{tpu_custom_call.1} parent=1 // pred_check
      _
    $region19: #{tpu_custom_call.1} parent=1 // pred_check_branch
      %59 = sbr.rel (0) target = $region21
    $region20: #{tpu_custom_call.1} parent=1 // pred_region
      %60 = dma.done [#allocation4], 128
    $region21: #{tpu_custom_call.1} parent=1 // pred_fallthru
      _
    // Predicated region
    $region22: #{tpu_custom_call.1} parent=1 // pred_check
      _
    $region23: #{tpu_custom_call.1} parent=1 // pred_check_branch
      %62 = sbr.rel (0) target = $region25
    $region24: #{tpu_custom_call.1} parent=1 // pred_region
      %63 = dma.done [#allocation7], 8192
    $region25: #{tpu_custom_call.1} parent=1 // pred_fallthru
      _
    // Predicated region
    $region26: #{tpu_custom_call.1} parent=1 // pred_check
      _
    $region27: #{tpu_custom_call.1} parent=1 // pred_check_branch
      %65 = sbr.rel (0) target = $region29
    $region28: #{tpu_custom_call.1} parent=1 // pred_region
      %66 = dma.done [#allocation7], 64
    $region29: #{tpu_custom_call.1} parent=1 // pred_fallthru
      _
    // Predicated region
    $region30: #{tpu_custom_call.1} parent=1 // pred_check
      _
    $region31: #{tpu_custom_call.1} parent=1 // pred_check_branch
      %68 = sbr.rel (0) target = $region33
    $region32: #{tpu_custom_call.1} parent=1 // pred_region
      %69 = dma.done [#allocation10], 128
    $region33: #{tpu_custom_call.1} parent=1 // pred_fallthru
      _
    %v70 = vld [vmem:[#allocation3] sm:$0xff]
    %v71 = vld [vmem:[#allocation6] sm:$0xff]
    %v72 = vld [vmem:[#allocation6 + $0x8] sm:$0xff]
    %v73 = vld [vmem:[#allocation6 + $0x10] sm:$0xff]
    %v74 = vld [vmem:[#allocation6 + $0x18] sm:$0xff]
    %v75 = vld [vmem:[#allocation6 + $0x20] sm:$0xff]
    %v76 = vld [vmem:[#allocation6 + $0x28] sm:$0xff]
    %v77 = vld [vmem:[#allocation6 + $0x30] sm:$0xff]
    %v78 = vld [vmem:[#allocation6 + $0x38] sm:$0xff]
    %v79 = vld [vmem:[#allocation6 + $0x40] sm:$0xff]
    %v80 = vld [vmem:[#allocation6 + $0x48] sm:$0xff]
    %v81 = vld [vmem:[#allocation6 + $0x50] sm:$0xff]
    %v82 = vld [vmem:[#allocation6 + $0x58] sm:$0xff]
    %v83 = vld [vmem:[#allocation6 + $0x60] sm:$0xff]
    %v84 = vld [vmem:[#allocation6 + $0x68] sm:$0xff]
    %v85 = vld [vmem:[#allocation6 + $0x70] sm:$0xff]
    %v86 = vld [vmem:[#allocation6 + $0x78] sm:$0xff]
    %v87 = vld [vmem:[#allocation6 + $0x80] sm:$0xff]
    %v88 = vld [vmem:[#allocation6 + $0x88] sm:$0xff]
    %v89 = vld [vmem:[#allocation6 + $0x90] sm:$0xff]
    %v90 = vld [vmem:[#allocation6 + $0x98] sm:$0xff]
    %v91 = vld [vmem:[#allocation6 + $0xa0] sm:$0xff]
    %v92 = vld [vmem:[#allocation6 + $0xa8] sm:$0xff]
    %v93 = vld [vmem:[#allocation6 + $0xb0] sm:$0xff]
    %v94 = vld [vmem:[#allocation6 + $0xb8] sm:$0xff]
    %v95 = vld [vmem:[#allocation6 + $0xc0] sm:$0xff]
    %v96 = vld [vmem:[#allocation6 + $0xc8] sm:$0xff]
    %v97 = vld [vmem:[#allocation6 + $0xd0] sm:$0xff]
    %v98 = vld [vmem:[#allocation6 + $0xd8] sm:$0xff]
    %v99 = vld [vmem:[#allocation6 + $0xe0] sm:$0xff]
    %v100 = vld [vmem:[#allocation6 + $0xe8] sm:$0xff]
    %v101 = vld [vmem:[#allocation6 + $0xf0] sm:$0xff]
    %v102 = vld [vmem:[#allocation6 + $0xf8] sm:$0xff]
    %v103 = vld [vmem:[#allocation6 + $0x100] sm:$0xff]
    %v104 = vld [vmem:[#allocation6 + $0x108] sm:$0xff]
    %v105 = vld [vmem:[#allocation6 + $0x110] sm:$0xff]
    %v106 = vld [vmem:[#allocation6 + $0x118] sm:$0xff]
    %v107 = vld [vmem:[#allocation6 + $0x120] sm:$0xff]
    %v108 = vld [vmem:[#allocation6 + $0x128] sm:$0xff]
    %v109 = vld [vmem:[#allocation6 + $0x130] sm:$0xff]
    %v110 = vld [vmem:[#allocation6 + $0x138] sm:$0xff]
    %v111 = vld [vmem:[#allocation6 + $0x140] sm:$0xff]
    %v112 = vld [vmem:[#allocation6 + $0x148] sm:$0xff]
    %v113 = vld [vmem:[#allocation6 + $0x150] sm:$0xff]
    %v114 = vld [vmem:[#allocation6 + $0x158] sm:$0xff]
    %v115 = vld [vmem:[#allocation6 + $0x160] sm:$0xff]
    %v116 = vld [vmem:[#allocation6 + $0x168] sm:$0xff]
    %v117 = vld [vmem:[#allocation6 + $0x170] sm:$0xff]
    %v118 = vld [vmem:[#allocation6 + $0x178] sm:$0xff]
    %v119 = vld [vmem:[#allocation6 + $0x180] sm:$0xff]
    %v120 = vld [vmem:[#allocation6 + $0x188] sm:$0xff]
    %v121 = vld [vmem:[#allocation6 + $0x190] sm:$0xff]
    %v122 = vld [vmem:[#allocation6 + $0x198] sm:$0xff]
    %v123 = vld [vmem:[#allocation6 + $0x1a0] sm:$0xff]
    %v124 = vld [vmem:[#allocation6 + $0x1a8] sm:$0xff]
    %v125 = vld [vmem:[#allocation6 + $0x1b0] sm:$0xff]
    %v126 = vld [vmem:[#allocation6 + $0x1b8] sm:$0xff]
    %v127 = vld [vmem:[#allocation6 + $0x1c0] sm:$0xff]
    %v128 = vld [vmem:[#allocation6 + $0x1c8] sm:$0xff]
    %v129 = vld [vmem:[#allocation6 + $0x1d0] sm:$0xff]
    %v130 = vld [vmem:[#allocation6 + $0x1d8] sm:$0xff]
    %v131 = vld [vmem:[#allocation6 + $0x1e0] sm:$0xff]
    %v132 = vld [vmem:[#allocation6 + $0x1e8] sm:$0xff]
    %v133 = vld [vmem:[#allocation6 + $0x1f0] sm:$0xff]
    %v134 = vld [vmem:[#allocation6 + $0x1f8] sm:$0xff]
    %v135 = vld [vmem:[#allocation8] sm:$0xf]
    %v137 = vlaneseq
    %v138 = vshrl.u32 %v137, 7
    %v139 = vsub.s32 0, %v138
    %v140 = vrot.slane %v135, %v139
    %v141 = vlaneseq
    %v142 = vshrl.u32 %v141, 7
    %v143 = vsub.s32 1, %v142
    %v144 = vrot.slane %v135, %v143
    %v145 = vlaneseq
    %v146 = vshrl.u32 %v145, 7
    %v147 = vsub.s32 2, %v146
    %v148 = vrot.slane %v135, %v147
    %v149 = vlaneseq
    %v150 = vshrl.u32 %v149, 7
    %v151 = vsub.s32 3, %v150
    %v152 = vrot.slane %v135, %v151
    %157 = vmatprep.subr.mxu0 %v132
    %158 = vmatpush1.msra.mxu0 %v131
    %159 = vmatprep.subr.mxu0 %v128
    %160 = vmatpush1.msra.mxu0 %v127
    %161 = vmatprep.subr.mxu0 %v124
    %162 = vmatpush1.msra.mxu0 %v123
    %163 = vmatprep.subr.mxu0 %v120
    %164 = vmatpush1.msra.mxu0 %v119
    %165 = vmatprep.subr.mxu0 %v116
    %166 = vmatpush1.msra.mxu0 %v115
    %167 = vmatprep.subr.mxu0 %v112
    %168 = vmatpush1.msra.mxu0 %v111
    %169 = vmatprep.subr.mxu0 %v108
    %170 = vmatpush1.msra.mxu0 %v107
    %171 = vmatprep.subr.mxu0 %v104
    %172 = vmatpush1.msra.mxu0 %v103
    %173 = vmatprep.subr.mxu0 %v100
    %174 = vmatpush1.msra.mxu0 %v99
    %175 = vmatprep.subr.mxu0 %v96
    %176 = vmatpush1.msra.mxu0 %v95
    %177 = vmatprep.subr.mxu0 %v92
    %178 = vmatpush1.msra.mxu0 %v91
    %179 = vmatprep.subr.mxu0 %v88
    %180 = vmatpush1.msra.mxu0 %v87
    %181 = vmatprep.subr.mxu0 %v84
    %182 = vmatpush1.msra.mxu0 %v83
    %183 = vmatprep.subr.mxu0 %v80
    %184 = vmatpush1.msra.mxu0 %v79
    %185 = vmatprep.subr.mxu0 %v76
    %186 = vmatpush1.msra.mxu0 %v75
    %187 = vmatprep.subr.mxu0 %v72
    %188 = vmatpush1.msra.mxu0 %v71
    %189 = vmatprep.subr.mxu0 0.0
    %190 = vmatpush2.msra.mxu0 0.0
    %191 = vmatprep.subr.mxu0 0.0
    %192 = vmatpush2.msra.mxu0 0.0
    %193 = vmatprep.subr.mxu0 0.0
    %194 = vmatpush2.msra.mxu0 0.0
    %195 = vmatprep.subr.mxu0 0.0
    %196 = vmatpush2.msra.mxu0 0.0
    %197 = vmatprep.subr.mxu0 0.0
    %198 = vmatpush2.msra.mxu0 0.0
    %199 = vmatprep.subr.mxu0 0.0
    %200 = vmatpush2.msra.mxu0 0.0
    %201 = vmatprep.subr.mxu0 0.0
    %202 = vmatpush2.msra.mxu0 0.0
    %203 = vmatprep.subr.mxu0 0.0
    %204 = vmatpush2.msra.mxu0 0.0
    %205 = vmatprep.subr.mxu0 0.0
    %206 = vmatpush2.msra.mxu0 0.0
    %207 = vmatprep.subr.mxu0 0.0
    %208 = vmatpush2.msra.mxu0 0.0
    %209 = vmatprep.subr.mxu0 0.0
    %210 = vmatpush2.msra.mxu0 0.0
    %211 = vmatprep.subr.mxu0 0.0
    %212 = vmatpush2.msra.mxu0 0.0
    %213 = vmatprep.subr.mxu0 0.0
    %214 = vmatpush2.msra.mxu0 0.0
    %215 = vmatprep.subr.mxu0 0.0
    %216 = vmatpush2.msra.mxu0 0.0
    %217 = vmatprep.subr.mxu0 0.0
    %218 = vmatpush2.msra.mxu0 0.0
    %219 = vmatprep.subr.mxu0 0.0
    %220 = vmatpush2.msra.mxu0 0.0
    %221 = vmatprep.mubr.f32.mxu0 0.0
    %222 = vmatmul.mubr.f32.gmra.mxu0 %v70
    %v223 = vpop.f32.mrf.mxu0
    %v224 = vadd.f32 %v140, %v223
    %v225 = vpop.f32.mrf.mxu0
    %v226 = vadd.f32 %v144, %v225
    %227 = vdwg.mxu0
    %228 = vmatprep.subr.mxu0 %v134
    %229 = vmatpush1.msra.mxu0 %v133
    %230 = vmatprep.subr.mxu0 %v130
    %231 = vmatpush1.msra.mxu0 %v129
    %232 = vmatprep.subr.mxu0 %v126
    %233 = vmatpush1.msra.mxu0 %v125
    %234 = vmatprep.subr.mxu0 %v122
    %235 = vmatpush1.msra.mxu0 %v121
    %236 = vmatprep.subr.mxu0 %v118
    %237 = vmatpush1.msra.mxu0 %v117
    %238 = vmatprep.subr.mxu0 %v114
    %239 = vmatpush1.msra.mxu0 %v113
    %240 = vmatprep.subr.mxu0 %v110
    %241 = vmatpush1.msra.mxu0 %v109
    %242 = vmatprep.subr.mxu0 %v106
    %243 = vmatpush1.msra.mxu0 %v105
    %244 = vmatprep.subr.mxu0 %v102
    %245 = vmatpush1.msra.mxu0 %v101
    %246 = vmatprep.subr.mxu0 %v98
    %247 = vmatpush1.msra.mxu0 %v97
    %248 = vmatprep.subr.mxu0 %v94
    %249 = vmatpush1.msra.mxu0 %v93
    %250 = vmatprep.subr.mxu0 %v90
    %251 = vmatpush1.msra.mxu0 %v89
    %252 = vmatprep.subr.mxu0 %v86
    %253 = vmatpush1.msra.mxu0 %v85
    %254 = vmatprep.subr.mxu0 %v82
    %255 = vmatpush1.msra.mxu0 %v81
    %256 = vmatprep.subr.mxu0 %v78
    %257 = vmatpush1.msra.mxu0 %v77
    %258 = vmatprep.subr.mxu0 %v74
    %259 = vmatpush1.msra.mxu0 %v73
    %260 = vmatprep.subr.mxu0 0.0
    %261 = vmatpush2.msra.mxu0 0.0
    %262 = vmatprep.subr.mxu0 0.0
    %263 = vmatpush2.msra.mxu0 0.0
    %264 = vmatprep.subr.mxu0 0.0
    %265 = vmatpush2.msra.mxu0 0.0
    %266 = vmatprep.subr.mxu0 0.0
    %267 = vmatpush2.msra.mxu0 0.0
    %268 = vmatprep.subr.mxu0 0.0
    %269 = vmatpush2.msra.mxu0 0.0
    %270 = vmatprep.subr.mxu0 0.0
    %271 = vmatpush2.msra.mxu0 0.0
    %272 = vmatprep.subr.mxu0 0.0
    %273 = vmatpush2.msra.mxu0 0.0
    %274 = vmatprep.subr.mxu0 0.0
    %275 = vmatpush2.msra.mxu0 0.0
    %276 = vmatprep.subr.mxu0 0.0
    %277 = vmatpush2.msra.mxu0 0.0
    %278 = vmatprep.subr.mxu0 0.0
    %279 = vmatpush2.msra.mxu0 0.0
    %280 = vmatprep.subr.mxu0 0.0
    %281 = vmatpush2.msra.mxu0 0.0
    %282 = vmatprep.subr.mxu0 0.0
    %283 = vmatpush2.msra.mxu0 0.0
    %284 = vmatprep.subr.mxu0 0.0
    %285 = vmatpush2.msra.mxu0 0.0
    %286 = vmatprep.subr.mxu0 0.0
    %287 = vmatpush2.msra.mxu0 0.0
    %288 = vmatprep.subr.mxu0 0.0
    %289 = vmatpush2.msra.mxu0 0.0
    %290 = vmatprep.subr.mxu0 0.0
    %291 = vmatpush2.msra.mxu0 0.0
    %292 = vmatprep.mubr.f32.mxu0 0.0
    %293 = vmatmul.mubr.f32.gmra.mxu0 %v70
    %v294 = vpop.f32.mrf.mxu0
    %v295 = vadd.f32 %v148, %v294
    %v296 = vpop.f32.mrf.mxu0
    %v297 = vadd.f32 %v152, %v296
    %298 = vdwg.mxu0
    %299 = vst [vmem:[#allocation2] sm:$0xff] %v224
    %300 = vst [vmem:[#allocation2 + $0x8] sm:$0xff] %v226
    %301 = vst [vmem:[#allocation2 + $0x10] sm:$0xff] %v295
    %302 = vst [vmem:[#allocation2 + $0x18] sm:$0xff] %v297
    %v303 = vld [vmem:[#allocation2] sm:$0xff]
    %v304 = vtanh.pop %v303
    %v305 = vmul.f32 %v304, 0.5
    %v306 = vadd.f32 %v305, 0.5
    %v307 = vld [vmem:[#allocation2 + $0x8] sm:$0xff]
    %v308 = vtanh.pop %v307
    %v309 = vmul.f32 %v308, 0.5
    %v310 = vadd.f32 %v309, 0.5
    %v311 = vld [vmem:[#allocation2 + $0x10] sm:$0xff]
    %v312 = vtanh.pop %v311
    %v313 = vmul.f32 %v312, 0.5
    %v314 = vadd.f32 %v313, 0.5
    %v315 = vld [vmem:[#allocation2 + $0x18] sm:$0xff]
    %v316 = vtanh.pop %v315
    %v317 = vmul.f32 %v310, %v316
    %v318 = vld [vmem:[#allocation9] sm:$0xff]
    %v319 = vmul.f32 %v306, %v318
    %v320 = vadd.f32 %v317, %v319
    %v321 = vtanh.pop %v320
    %v322 = vmul.f32 %v314, %v321
    %323 = vst [vmem:[#allocation12] sm:$0xff] %v320
    %324 = vst [vmem:[#allocation11] sm:$0xff] %v322
    // Predicated region
    $region34: #{tpu_custom_call.1} parent=1 // pred_check
      _
    $region35: #{tpu_custom_call.1} parent=1 // pred_check_branch
      %326 = sbr.rel (0) target = $region37
    $region36: #{tpu_custom_call.1} parent=1 // pred_region
      %s328 = ssub.s32 128, 128
      %329 = vsyncadd [#allocation5], %s328
      %s331 = sshll.u32 [#allocation11], 4
      %s332 = int_to_ptr.vmem [resolvable:$true] %s331
      %334 = dma.vmem_to_hbm [thread:$0]  %s332, 128, %s4, [#allocation5]
    $region37: #{tpu_custom_call.1} parent=1 // pred_fallthru
      _
    // Predicated region
    $region38: #{tpu_custom_call.1} parent=1 // pred_check
      _
    $region39: #{tpu_custom_call.1} parent=1 // pred_check_branch
      %336 = sbr.rel (0) target = $region41
    $region40: #{tpu_custom_call.1} parent=1 // pred_region
      %s338 = ssub.s32 128, 128
      %339 = vsyncadd [#allocation13], %s338
      %s341 = sshll.u32 [#allocation12], 4
      %s342 = int_to_ptr.vmem [resolvable:$true] %s341
      %344 = dma.vmem_to_hbm [thread:$0]  %s342, 128, %s5, [#allocation13]
    $region41: #{tpu_custom_call.1} parent=1 // pred_fallthru
      _
    // Predicated region
    $region42: #{tpu_custom_call.1} parent=1 // pred_check
      _
    $region43: #{tpu_custom_call.1} parent=1 // pred_check_branch
      %346 = sbr.rel (0) target = $region45
    $region44: #{tpu_custom_call.1} parent=1 // pred_region
      %347 = dma.done [#allocation5], 128
    $region45: #{tpu_custom_call.1} parent=1 // pred_fallthru
      _
    // Predicated region
    $region46: #{tpu_custom_call.1} parent=1 // pred_check
      _
    $region47: #{tpu_custom_call.1} parent=1 // pred_check_branch
      %349 = sbr.rel (0) target = $region49
    $region48: #{tpu_custom_call.1} parent=1 // pred_region
      %350 = dma.done [#allocation13], 128
    $region49: #{tpu_custom_call.1} parent=1 // pred_fallthru
      _
    %351 = vsyncpa [#allocation4], 1
    %352 = vsyncpa [#allocation7], 1
    %353 = vsyncpa [#allocation10], 1
    %354 = vsyncpa [#allocation5], 1
    %355 = vsyncpa [#allocation13], 1

</llo_original>
